<compile_context>
chip_gen: v6e
topology: v6e:2x2x1
jax: 0.10.0
libtpu: 0.0.40
codegen_flags: <defaults>
</compile_context>

<pallas_src>
import functools

import jax
import jax.numpy as jnp
from jax import lax
from jax.experimental import pallas as pl
from jax.experimental.pallas import tpu as pltpu

_TM_MAX = 256      # row-tile size for the gridded (large-N) path
_BIG = 1e30        # finite masking constant (never +-inf -> never NaN)


def _round_up(x, m):
    return ((x + m - 1) // m) * m


# ---------------------------------------------------------------------------
# In-kernel helpers (operate on one (tm, N) row tile).
# ---------------------------------------------------------------------------
def _phase1_mine(x_ref, sq_row, lab_col_ref, lab_row_ref, row0, tm, n_valid,
                 need_idx):
    """Batch-hard mining + pair log_softmax for one row tile of emb1.

    Returns (log_ap, log_an, ap_idx, an_idx), each (tm, 1) (indices None when
    need_idx=False).
    """
    f32 = jnp.float32
    n_pad = x_ref.shape[0]
    single = (tm == n_pad)

    x_full = x_ref[...]
    x_tile = x_full if single else x_ref[pl.ds(row0, tm), :]
    lab_t = lab_col_ref[...] if single else lab_col_ref[pl.ds(row0, tm), :]

    # (tm, N) Gram tile on the MXU.  Contraction on dim 1 of both operands is
    # the A.B^T form the MXU consumes directly (no relayout of the (N, D) rhs).
    gram = lax.dot_general(x_tile, x_full, (((1,), (1,)), ((), ())),
                           preferred_element_type=f32)
    r = sq_row - 2.0 * gram                                   # (tm, N)
    sq_t = jnp.sum(x_tile * x_tile, axis=1, keepdims=True)    # (tm, 1)

    ci = lax.broadcasted_iota(jnp.int32, (1, n_pad), 1)       # (1, N) col ids
    col_valid = ci < n_valid                                  # (1, N)
    sim = lab_t == lab_row_ref[...]                           # (tm, N)
    pos_mask = jnp.logical_and(sim, col_valid)
    neg_mask = jnp.logical_and(col_valid, jnp.logical_not(sim))

    masked_p = jnp.where(pos_mask, r, -_BIG)
    masked_n = jnp.where(neg_mask, r, _BIG)
    hard_p_r = jnp.max(masked_p, axis=1, keepdims=True)       # (tm, 1)
    hard_n_r = jnp.min(masked_n, axis=1, keepdims=True)

    if need_idx:
        # First index attaining the extremum (same tie-break as jnp.argmax).
        ap_idx = jnp.min(jnp.where(masked_p == hard_p_r, ci, n_pad),
                         axis=1, keepdims=True)
        an_idx = jnp.min(jnp.where(masked_n == hard_n_r, ci, n_pad),
                         axis=1, keepdims=True)
    else:
        ap_idx = an_idx = None

    # sqrt / clamp only on the (tm, 1) winners (monotone -> mining unchanged).
    hard_p = jnp.sqrt(jnp.maximum(hard_p_r + sq_t, 1e-12))
    hard_n = jnp.sqrt(jnp.maximum(hard_n_r + sq_t, 1e-12))

    # log_softmax over the (hard_p, hard_n) pair, per row.
    m = jnp.maximum(hard_p, hard_n)
    ep = jnp.exp(hard_p - m)
    en = jnp.exp(hard_n - m)
    lse = m + jnp.log(ep + en)
    return hard_p - lse, hard_n - lse, ap_idx, an_idx


def _phase2_reference(x2_ref, sq2_row, row0, tm, ap_idx, an_idx,
                      log_ap, log_an):
    """emb2 reference distances at (ap_idx, an_idx) -> per-row soft loss."""
    f32 = jnp.float32
    n_pad = x2_ref.shape[0]
    single = (tm == n_pad)

    x2_full = x2_ref[...]
    x2_tile = x2_full if single else x2_ref[pl.ds(row0, tm), :]

    gram2 = lax.dot_general(x2_tile, x2_full, (((1,), (1,)), ((), ())),
                            preferred_element_type=f32)
    r2 = sq2_row - 2.0 * gram2                                # (tm, N)
    sq2_t = jnp.sum(x2_tile * x2_tile, axis=1, keepdims=True)

    # Exact one-hot gathers r2[i, ap_idx[i]] / r2[i, an_idx[i]].
    ci = lax.broadcasted_iota(jnp.int32, (1, n_pad), 1)
    g_ap = jnp.sum(jnp.where(ci == ap_idx, r2, 0.0), axis=1, keepdims=True)
    g_an = jnp.sum(jnp.where(ci == an_idx, r2, 0.0), axis=1, keepdims=True)
    dist_ap_ref = jnp.sqrt(jnp.maximum(g_ap + sq2_t, 1e-12))
    dist_an_ref = jnp.sqrt(jnp.maximum(g_an + sq2_t, 1e-12))

    # softmax over the reference pair; exact reciprocal on the (tm, 1) vector.
    mr = jnp.maximum(dist_ap_ref, dist_an_ref)
    ep = jnp.exp(dist_ap_ref - mr)
    en = jnp.exp(dist_an_ref - mr)
    inv = 1.0 / (ep + en)
    p_ap = ep * inv
    p_an = en * inv
    # (-triple_dist_ref * triple_dist) summed over the pair, per row.
    return -(p_ap * log_ap + p_an * log_an)


# ---------------------------------------------------------------------------
# Kernels.
# ---------------------------------------------------------------------------
def _margin_kernel(x1_ref, sq1_ref, labc_ref, labr_ref, out_ref, *,
                   margin, n_valid, tm):
    row0 = pl.multiple_of(pl.program_id(0) * tm, tm)
    log_ap, log_an, _, _ = _phase1_mine(x1_ref, sq1_ref[...], labc_ref,
                                        labr_ref, row0, tm, n_valid,
                                        need_idx=False)
    out_ref[...] = -margin * log_ap - (1.0 - margin) * log_an


def _soft_kernel_resident(x1_ref, sq1_ref, labc_ref, labr_ref, x2_ref, sq2_ref,
                          out_ref, *, n_valid, tm):
    row0 = pl.multiple_of(pl.program_id(0) * tm, tm)
    log_ap, log_an, ap_idx, an_idx = _phase1_mine(
        x1_ref, sq1_ref[...], labc_ref, labr_ref, row0, tm, n_valid,
        need_idx=True)
    out_ref[...] = _phase2_reference(x2_ref, sq2_ref[...], row0, tm,
                                     ap_idx, an_idx, log_ap, log_an)


def _soft_kernel_overlap(x1_ref, sq1_ref, labc_ref, labr_ref, x2_hbm_ref,
                         sq2_ref, out_ref, x2_vmem, dma_sem, *, n_valid, tm):
    # emb2 stays in HBM; start its copy now so it overlaps the emb1 phase.
    cp = pltpu.make_async_copy(x2_hbm_ref, x2_vmem, dma_sem)
    cp.start()
    row0 = pl.multiple_of(pl.program_id(0) * tm, tm)
    log_ap, log_an, ap_idx, an_idx = _phase1_mine(
        x1_ref, sq1_ref[...], labc_ref, labr_ref, row0, tm, n_valid,
        need_idx=True)
    cp.wait()
    out_ref[...] = _phase2_reference(x2_vmem, sq2_ref[...], row0, tm,
                                     ap_idx, an_idx, log_ap, log_an)


# ---------------------------------------------------------------------------
# Wrapper.
# ---------------------------------------------------------------------------
def soft_triplet_loss_old(emb1, emb2, label, *, margin=None,
                          normalize_feature=False):
    """Pallas implementation of SoftTripletLoss_old.forward (returns scalar).

    # TODO(synk): no custom_vjp is defined (pallas_call is not differentiable);
    # wrap with jax.custom_vjp for training under jax.grad.
    """
    f32, i32 = jnp.float32, jnp.int32
    emb1 = emb1.astype(f32)
    label = label.astype(i32)
    if normalize_feature:   # F.normalize, done wrapper-side (one N x D pass)
        emb1 = emb1 / jnp.maximum(
            jnp.linalg.norm(emb1, axis=1, keepdims=True), 1e-12)
    n, d = emb1.shape

    d_pad = _round_up(max(d, 128), 128)
    if n <= _TM_MAX:
        # Small batch: one full-array tile; N padded only to a sublane multiple
        # of 8 (full-array blocks bypass the (8,128) BlockSpec rule).
        tm = _round_up(max(n, 8), 8)
        n_pad = tm
    else:
        tm = _TM_MAX
        n_pad = _round_up(n, tm)
    grid = (n_pad // tm,)

    e1 = jnp.zeros((n_pad, d_pad), f32).at[:n, :d].set(emb1)
    sq1 = jnp.sum(e1 * e1, axis=1).reshape(1, n_pad)   # padded rows -> 0
    lab = jnp.zeros((n_pad,), i32).at[:n].set(label)
    lab_col = lab.reshape(n_pad, 1)
    lab_row = lab.reshape(1, n_pad)

    def full(shape):
        return pl.BlockSpec(shape, lambda i: (0, 0))   # resident across grid

    common_specs = [full((n_pad, d_pad)), full((1, n_pad)),
                    full((n_pad, 1)), full((1, n_pad))]
    out_spec = pl.BlockSpec((tm, 1), lambda i: (i, 0))
    out_shape = jax.ShapeDtypeStruct((n_pad, 1), f32)

    # Per-generation VMEM budget: request what we need, capped at ~80% of the
    # physical capacity (v5e/v6e: 128 MiB, v7x: 64 MiB) to leave Mosaic
    # headroom; never below the 32 MiB default scoped limit.
    try:
        cap = int(getattr(pltpu.get_tpu_info(), "vmem_capacity_bytes",
                          64 << 20))
    except Exception:
        cap = 64 << 20
    n_emb = 1 if margin is not None else 2
    resident = 4 * (n_emb * (n_pad * d_pad + n_pad) + 2 * n_pad)
    if margin is None and grid[0] == 1:
        resident += 4 * n_pad * d_pad          # emb2 VMEM scratch (overlap)
    per_step = 4 * (10 * tm * n_pad + 2 * tm * d_pad + 8 * tm)
    needed = resident + 2 * per_step + (4 << 20)
    vmem_limit = int(min(max(needed, 32 << 20), int(cap * 0.8)))

    cparams = pltpu.CompilerParams(
        dimension_semantics=("parallel",),     # row tiles are independent
        vmem_limit_bytes=vmem_limit)

    if margin is not None:
        # Hard-margin path: emb2 is never read -> never DMA'd; index mining is
        # skipped entirely inside _phase1_mine.
        kernel = functools.partial(_margin_kernel, margin=float(margin),
                                   n_valid=n, tm=tm)
        out = pl.pallas_call(
            kernel, grid=grid, out_shape=out_shape,
            in_specs=common_specs, out_specs=out_spec,
            compiler_params=cparams,
        )(e1, sq1, lab_col, lab_row)
    else:
        e2 = emb2.astype(f32)
        if normalize_feature:
            e2 = e2 / jnp.maximum(
                jnp.linalg.norm(e2, axis=1, keepdims=True), 1e-12)
        e2p = jnp.zeros((n_pad, d_pad), f32).at[:n, :d].set(e2)
        sq2 = jnp.sum(e2p * e2p, axis=1).reshape(1, n_pad)

        if grid[0] == 1:
            # Single tile: keep emb2 in HBM and overlap its copy with the emb1
            # Gram/mining phase via a manual async DMA.
            kernel = functools.partial(_soft_kernel_overlap, n_valid=n, tm=tm)
            out = pl.pallas_call(
                kernel, grid=grid, out_shape=out_shape,
                in_specs=common_specs + [pl.BlockSpec(memory_space=pl.ANY),
                                         full((1, n_pad))],
                out_specs=out_spec,
                scratch_shapes=[pltpu.VMEM((n_pad, d_pad), f32),
                                pltpu.SemaphoreType.DMA(())],
                compiler_params=cparams,
            )(e1, sq1, lab_col, lab_row, e2p, sq2)
        else:
            # Row-tiled grid (large N): emb1/emb2 stay resident in VMEM while
            # each step works on one (tm, N) slab.
            # TODO(synk): if 2*N*D*4B exceeds ~80% of VMEM (e.g. N=4096,
            # D=2048 on v7x) the resident embeddings no longer fit; a
            # column-tiled second grid axis (or bf16 operands) is needed.
            kernel = functools.partial(_soft_kernel_resident, n_valid=n, tm=tm)
            out = pl.pallas_call(
                kernel, grid=grid, out_shape=out_shape,
                in_specs=common_specs + [full((n_pad, d_pad)),
                                         full((1, n_pad))],
                out_specs=out_spec,
                compiler_params=cparams,
            )(e1, sq1, lab_col, lab_row, e2p, sq2)

    # Per-row losses -> scalar mean over the n valid rows (padded rows dropped
    # by the slice, so any garbage they hold never reaches the result).
    return jnp.sum(out[:n, 0]) / n


# ---------------- pure-JAX reference (mirrors the PyTorch module) -----------
def _ref_euclidean(x, y):
    xx = jnp.sum(x * x, axis=1, keepdims=True)
    yy = jnp.sum(y * y, axis=1, keepdims=True).T
    d2 = xx + yy - 2.0 * (x @ y.T)
    return jnp.sqrt(jnp.clip(d2, 1e-12, None))


def _ref_loss(emb1, emb2, label, margin=None, normalize_feature=False):
    if normalize_feature:
        emb1 = emb1 / jnp.maximum(
            jnp.linalg.norm(emb1, axis=1, keepdims=True), 1e-12)
        emb2 = emb2 / jnp.maximum(
            jnp.linalg.norm(emb2, axis=1, keepdims=True), 1e-12)
    mat_dist = _ref_euclidean(emb1, emb1)
    n = mat_dist.shape[0]
    sim = (label[:, None] == label[None, :]).astype(jnp.float32)
    masked_p = mat_dist + (-9999999.0) * (1.0 - sim)
    masked_n = mat_dist + 9999999.0 * sim
    dist_ap = jnp.max(masked_p, axis=1)
    dist_an = jnp.min(masked_n, axis=1)
    ap_idx = jnp.argmax(masked_p, axis=1)
    an_idx = jnp.argmin(masked_n, axis=1)
    triple = jnp.stack([dist_ap, dist_an], axis=1)
    triple = jax.nn.log_softmax(triple, axis=1)
    if margin is not None:
        return jnp.mean(-margin * triple[:, 0] - (1 - margin) * triple[:, 1])
    mat_dist_ref = _ref_euclidean(emb2, emb2)
    dist_ap_ref = mat_dist_ref[jnp.arange(n), ap_idx]
    dist_an_ref = mat_dist_ref[jnp.arange(n), an_idx]
    triple_ref = jax.nn.softmax(
        jnp.stack([dist_ap_ref, dist_an_ref], axis=1), axis=1)
    return jnp.sum(jnp.mean(-triple_ref * triple, axis=0))


if __name__ == "__main__":
    key = jax.random.PRNGKey(0)
    k1, k2, k3, k4 = jax.random.split(key, 4)

    # Small ReID-style batch: single-tile path, emb2 DMA overlapped.
    N, D = 8, 32
    emb1 = jax.random.normal(k1, (N, D), dtype=jnp.float32)
    emb2 = jax.random.normal(k2, (N, D), dtype=jnp.float32)
    label = jnp.array([0, 0, 1, 1, 2, 2, 3, 3], dtype=jnp.int32)

    loss = soft_triplet_loss_old(emb1, emb2, label)                # margin=None
    jax.block_until_ready(loss)
    ref = _ref_loss(emb1, emb2, label)
    assert jnp.allclose(loss, ref, rtol=2e-3, atol=2e-3), (loss, ref)

    loss_m = soft_triplet_loss_old(emb1, emb2, label, margin=0.3)  # margin path
    jax.block_until_ready(loss_m)
    ref_m = _ref_loss(emb1, emb2, label, margin=0.3)
    assert jnp.allclose(loss_m, ref_m, rtol=5e-4, atol=5e-4), (loss_m, ref_m)

    loss_nf = soft_triplet_loss_old(emb1, emb2, label, normalize_feature=True)
    jax.block_until_ready(loss_nf)
    ref_nf = _ref_loss(emb1, emb2, label, normalize_feature=True)
    assert jnp.allclose(loss_nf, ref_nf, rtol=2e-3, atol=2e-3), (loss_nf, ref_nf)

    # Larger batch exercising the row-tiled grid path (tm=256, grid=(2,)).
    N2, D2 = 320, 64
    e1 = jax.random.normal(k3, (N2, D2), dtype=jnp.float32)
    e2 = jax.random.normal(k4, (N2, D2), dtype=jnp.float32)
    lab2 = (jnp.arange(N2, dtype=jnp.int32) % 40).astype(jnp.int32)

    loss2 = soft_triplet_loss_old(e1, e2, lab2)
    jax.block_until_ready(loss2)
    ref2 = _ref_loss(e1, e2, lab2)
    assert jnp.allclose(loss2, ref2, rtol=2e-3, atol=2e-3), (loss2, ref2)

    loss2_m = soft_triplet_loss_old(e1, e2, lab2, margin=0.3)
    jax.block_until_ready(loss2_m)
    ref2_m = _ref_loss(e1, e2, lab2, margin=0.3)
    assert jnp.allclose(loss2_m, ref2_m, rtol=5e-4, atol=5e-4), (loss2_m, ref2_m)

    print("KERNEL_OK")
</pallas_src>

<mosaic_0001>
module attributes {stable_mosaic.version = 11 : i64} {
  func.func @_soft_kernel_overlap(%arg0: i32, %arg1: memref<8x128xf32, #tpu.memory_space<vmem>>, %arg2: memref<1x8xf32, #tpu.memory_space<vmem>>, %arg3: memref<8x1xi32, #tpu.memory_space<vmem>>, %arg4: memref<1x8xi32, #tpu.memory_space<vmem>>, %arg5: memref<8x128xf32, #tpu.memory_space<any>>, %arg6: memref<1x8xf32, #tpu.memory_space<vmem>>, %arg7: memref<8x1xf32, #tpu.memory_space<vmem>>, %arg8: memref<8x128xf32, #tpu.memory_space<vmem>>, %arg9: memref<!tpu.dma_semaphore, #tpu.memory_space<semaphore_mem>>) attributes {dimension_semantics = [#tpu.dimension_semantics<parallel>], iteration_bounds = array<i64: 1>, scalar_prefetch = 0 : i64, scratch_operands = 2 : i64, tpu.core_type = #tpu.core_type<tc>, window_params = [{pipeline_mode = #tpu.pipeline_mode<synchronous>, transform_indices = @transform_0, window_bounds = array<i64: 8, 128>}, {pipeline_mode = #tpu.pipeline_mode<synchronous>, transform_indices = @transform_1, window_bounds = array<i64: 1, 8>}, {pipeline_mode = #tpu.pipeline_mode<synchronous>, transform_indices = @transform_2, window_bounds = array<i64: 8, 1>}, {pipeline_mode = #tpu.pipeline_mode<synchronous>, transform_indices = @transform_3, window_bounds = array<i64: 1, 8>}, {}, {pipeline_mode = #tpu.pipeline_mode<synchronous>, transform_indices = @transform_5, window_bounds = array<i64: 1, 8>}, {transform_indices = @transform_6, window_bounds = array<i64: 8, 1>}]} {
    tpu.enqueue_dma source(%arg5 : memref<8x128xf32, #tpu.memory_space<any>>) target(%arg8 : memref<8x128xf32, #tpu.memory_space<vmem>>) target_semaphore(%arg9 : memref<!tpu.dma_semaphore, #tpu.memory_space<semaphore_mem>>)
    %c0 = arith.constant 0 : index
    %c0_0 = arith.constant 0 : index
    %0 = vector.load %arg2[%c0, %c0_0] : memref<1x8xf32, #tpu.memory_space<vmem>>, vector<1x8xf32>
    %c0_1 = arith.constant 0 : index
    %c0_2 = arith.constant 0 : index
    %1 = vector.load %arg1[%c0_1, %c0_2] : memref<8x128xf32, #tpu.memory_space<vmem>>, vector<8x128xf32>
    %c0_3 = arith.constant 0 : index
    %c0_4 = arith.constant 0 : index
    %2 = vector.load %arg3[%c0_3, %c0_4] : memref<8x1xi32, #tpu.memory_space<vmem>>, vector<8x1xi32>
    %cst = arith.constant dense<0.000000e+00> : vector<8x8xf32>
    %3 = tpu.matmul %1, %1, %cst {dimension_numbers = #tpu.dot_dimension_numbers<[1], [1], [0], [0], [0, 0, 1, 0], [], []>} : vector<8x128xf32>, vector<8x128xf32>, vector<8x8xf32> -> vector<8x8xf32>
    %cst_5 = arith.constant 2.000000e+00 : f32
    %4 = vector.broadcast %cst_5 : f32 to vector<8x8xf32>
    %5 = arith.mulf %4, %3 : vector<8x8xf32>
    %6 = vector.broadcast %0 : vector<1x8xf32> to vector<8x8xf32>
    %7 = arith.subf %6, %5 : vector<8x8xf32>
    %8 = arith.mulf %1, %1 : vector<8x128xf32>
    %cst_6 = arith.constant dense<0.000000e+00> : vector<8xf32>
    %9 = vector.multi_reduction <add>, %8, %cst_6 [1] : vector<8x128xf32> to vector<8xf32>
    %10 = vector.shape_cast %9 : vector<8xf32> to vector<8x1xf32>
    %11 = tpu.iota {dimensions = array<i32: 1>} : vector<1x8xi32>
    %c8_i32 = arith.constant 8 : i32
    %12 = vector.broadcast %c8_i32 : i32 to vector<1x8xi32>
    %13 = arith.cmpi slt, %11, %12 : vector<1x8xi32>
    %c0_7 = arith.constant 0 : index
    %c0_8 = arith.constant 0 : index
    %14 = vector.load %arg4[%c0_7, %c0_8] : memref<1x8xi32, #tpu.memory_space<vmem>>, vector<1x8xi32>
    %15 = vector.broadcast %2 : vector<8x1xi32> to vector<8x8xi32>
    %16 = vector.broadcast %14 : vector<1x8xi32> to vector<8x8xi32>
    %17 = arith.cmpi eq, %15, %16 : vector<8x8xi32>
    %18 = vector.broadcast %13 : vector<1x8xi1> to vector<8x8xi1>
    %19 = arith.andi %17, %18 : vector<8x8xi1>
    %cst_9 = arith.constant dense<true> : vector<8x8xi1>
    %20 = arith.xori %17, %cst_9 : vector<8x8xi1>
    %21 = vector.broadcast %13 : vector<1x8xi1> to vector<8x8xi1>
    %22 = arith.andi %21, %20 : vector<8x8xi1>
    %cst_10 = arith.constant -1.000000e+30 : f32
    %23 = vector.broadcast %cst_10 : f32 to vector<8x8xf32>
    %24 = arith.select %19, %7, %23 : vector<8x8xi1>, vector<8x8xf32>
    %cst_11 = arith.constant 1.000000e+30 : f32
    %25 = vector.broadcast %cst_11 : f32 to vector<8x8xf32>
    %26 = arith.select %22, %7, %25 : vector<8x8xi1>, vector<8x8xf32>
    %cst_12 = arith.constant dense<0xFF800000> : vector<8xf32>
    %27 = vector.multi_reduction <maximumf>, %24, %cst_12 [1] : vector<8x8xf32> to vector<8xf32>
    %28 = vector.shape_cast %27 : vector<8xf32> to vector<8x1xf32>
    %cst_13 = arith.constant dense<0x7F800000> : vector<8xf32>
    %29 = vector.multi_reduction <minimumf>, %26, %cst_13 [1] : vector<8x8xf32> to vector<8xf32>
    %30 = vector.shape_cast %29 : vector<8xf32> to vector<8x1xf32>
    %31 = vector.broadcast %28 : vector<8x1xf32> to vector<8x8xf32>
    %32 = arith.cmpf oeq, %24, %31 : vector<8x8xf32>
    %c8_i32_14 = arith.constant 8 : i32
    %33 = vector.shape_cast %11 : vector<1x8xi32> to vector<1x8xi32>
    %34 = vector.broadcast %33 : vector<1x8xi32> to vector<8x8xi32>
    %35 = vector.broadcast %c8_i32_14 : i32 to vector<8x8xi32>
    %36 = arith.select %32, %34, %35 : vector<8x8xi1>, vector<8x8xi32>
    %cst_15 = arith.constant dense<2147483647> : vector<8xi32>
    %37 = vector.multi_reduction <minsi>, %36, %cst_15 [1] : vector<8x8xi32> to vector<8xi32>
    %38 = vector.shape_cast %37 : vector<8xi32> to vector<8x1xi32>
    %39 = vector.broadcast %30 : vector<8x1xf32> to vector<8x8xf32>
    %40 = arith.cmpf oeq, %26, %39 : vector<8x8xf32>
    %c8_i32_16 = arith.constant 8 : i32
    %41 = vector.shape_cast %11 : vector<1x8xi32> to vector<1x8xi32>
    %42 = vector.broadcast %41 : vector<1x8xi32> to vector<8x8xi32>
    %43 = vector.broadcast %c8_i32_16 : i32 to vector<8x8xi32>
    %44 = arith.select %40, %42, %43 : vector<8x8xi1>, vector<8x8xi32>
    %cst_17 = arith.constant dense<2147483647> : vector<8xi32>
    %45 = vector.multi_reduction <minsi>, %44, %cst_17 [1] : vector<8x8xi32> to vector<8xi32>
    %46 = vector.shape_cast %45 : vector<8xi32> to vector<8x1xi32>
    %47 = arith.addf %28, %10 : vector<8x1xf32>
    %cst_18 = arith.constant 9.99999996E-13 : f32
    %48 = vector.broadcast %cst_18 : f32 to vector<8x1xf32>
    %49 = arith.maximumf %47, %48 : vector<8x1xf32>
    %50 = math.sqrt %49 : vector<8x1xf32>
    %51 = arith.addf %30, %10 : vector<8x1xf32>
    %cst_19 = arith.constant 9.99999996E-13 : f32
    %52 = vector.broadcast %cst_19 : f32 to vector<8x1xf32>
    %53 = arith.maximumf %51, %52 : vector<8x1xf32>
    %54 = math.sqrt %53 : vector<8x1xf32>
    %55 = arith.maximumf %50, %54 : vector<8x1xf32>
    %56 = arith.subf %50, %55 : vector<8x1xf32>
    %57 = math.exp %56 : vector<8x1xf32>
    %58 = arith.subf %54, %55 : vector<8x1xf32>
    %59 = math.exp %58 : vector<8x1xf32>
    %60 = arith.addf %57, %59 : vector<8x1xf32>
    %61 = math.log %60 : vector<8x1xf32>
    %62 = arith.addf %55, %61 : vector<8x1xf32>
    %63 = arith.subf %50, %62 : vector<8x1xf32>
    %64 = arith.subf %54, %62 : vector<8x1xf32>
    tpu.wait_dma2 semaphore(%arg9 : memref<!tpu.dma_semaphore, #tpu.memory_space<semaphore_mem>>) src(%arg5 : memref<8x128xf32, #tpu.memory_space<any>>) dst(%arg8 : memref<8x128xf32, #tpu.memory_space<vmem>>)
    %c0_20 = arith.constant 0 : index
    %c0_21 = arith.constant 0 : index
    %65 = vector.load %arg6[%c0_20, %c0_21] : memref<1x8xf32, #tpu.memory_space<vmem>>, vector<1x8xf32>
    %c0_22 = arith.constant 0 : index
    %c0_23 = arith.constant 0 : index
    %66 = vector.load %arg8[%c0_22, %c0_23] : memref<8x128xf32, #tpu.memory_space<vmem>>, vector<8x128xf32>
    %cst_24 = arith.constant dense<0.000000e+00> : vector<8x8xf32>
    %67 = tpu.matmul %66, %66, %cst_24 {dimension_numbers = #tpu.dot_dimension_numbers<[1], [1], [0], [0], [0, 0, 1, 0], [], []>} : vector<8x128xf32>, vector<8x128xf32>, vector<8x8xf32> -> vector<8x8xf32>
    %cst_25 = arith.constant 2.000000e+00 : f32
    %68 = vector.broadcast %cst_25 : f32 to vector<8x8xf32>
    %69 = arith.mulf %68, %67 : vector<8x8xf32>
    %70 = vector.broadcast %65 : vector<1x8xf32> to vector<8x8xf32>
    %71 = arith.subf %70, %69 : vector<8x8xf32>
    %72 = arith.mulf %66, %66 : vector<8x128xf32>
    %cst_26 = arith.constant dense<0.000000e+00> : vector<8xf32>
    %73 = vector.multi_reduction <add>, %72, %cst_26 [1] : vector<8x128xf32> to vector<8xf32>
    %74 = vector.shape_cast %73 : vector<8xf32> to vector<8x1xf32>
    %75 = tpu.iota {dimensions = array<i32: 1>} : vector<1x8xi32>
    %76 = vector.broadcast %75 : vector<1x8xi32> to vector<8x8xi32>
    %77 = vector.broadcast %38 : vector<8x1xi32> to vector<8x8xi32>
    %78 = arith.cmpi eq, %76, %77 : vector<8x8xi32>
    %cst_27 = arith.constant 0.000000e+00 : f32
    %79 = vector.broadcast %cst_27 : f32 to vector<8x8xf32>
    %80 = arith.select %78, %71, %79 : vector<8x8xi1>, vector<8x8xf32>
    %cst_28 = arith.constant dense<0.000000e+00> : vector<8xf32>
    %81 = vector.multi_reduction <add>, %80, %cst_28 [1] : vector<8x8xf32> to vector<8xf32>
    %82 = vector.shape_cast %81 : vector<8xf32> to vector<8x1xf32>
    %83 = vector.broadcast %75 : vector<1x8xi32> to vector<8x8xi32>
    %84 = vector.broadcast %46 : vector<8x1xi32> to vector<8x8xi32>
    %85 = arith.cmpi eq, %83, %84 : vector<8x8xi32>
    %cst_29 = arith.constant 0.000000e+00 : f32
    %86 = vector.broadcast %cst_29 : f32 to vector<8x8xf32>
    %87 = arith.select %85, %71, %86 : vector<8x8xi1>, vector<8x8xf32>
    %cst_30 = arith.constant dense<0.000000e+00> : vector<8xf32>
    %88 = vector.multi_reduction <add>, %87, %cst_30 [1] : vector<8x8xf32> to vector<8xf32>
    %89 = vector.shape_cast %88 : vector<8xf32> to vector<8x1xf32>
    %90 = arith.addf %82, %74 : vector<8x1xf32>
    %cst_31 = arith.constant 9.99999996E-13 : f32
    %91 = vector.broadcast %cst_31 : f32 to vector<8x1xf32>
    %92 = arith.maximumf %90, %91 : vector<8x1xf32>
    %93 = math.sqrt %92 : vector<8x1xf32>
    %94 = arith.addf %89, %74 : vector<8x1xf32>
    %cst_32 = arith.constant 9.99999996E-13 : f32
    %95 = vector.broadcast %cst_32 : f32 to vector<8x1xf32>
    %96 = arith.maximumf %94, %95 : vector<8x1xf32>
    %97 = math.sqrt %96 : vector<8x1xf32>
    %98 = arith.maximumf %93, %97 : vector<8x1xf32>
    %99 = arith.subf %93, %98 : vector<8x1xf32>
    %100 = math.exp %99 : vector<8x1xf32>
    %101 = arith.subf %97, %98 : vector<8x1xf32>
    %102 = math.exp %101 : vector<8x1xf32>
    %103 = arith.addf %100, %102 : vector<8x1xf32>
    %cst_33 = arith.constant 1.000000e+00 : f32
    %104 = vector.broadcast %cst_33 : f32 to vector<8x1xf32>
    %105 = arith.divf %104, %103 : vector<8x1xf32>
    %106 = arith.mulf %100, %105 : vector<8x1xf32>
    %107 = arith.mulf %102, %105 : vector<8x1xf32>
    %108 = arith.mulf %106, %63 : vector<8x1xf32>
    %109 = arith.mulf %107, %64 : vector<8x1xf32>
    %110 = arith.addf %108, %109 : vector<8x1xf32>
    %cst_34 = arith.constant 0.000000e+00 : f32
    %111 = vector.broadcast %cst_34 : f32 to vector<8x1xf32>
    %112 = arith.subf %111, %110 : vector<8x1xf32>
    %c0_35 = arith.constant 0 : index
    %c0_36 = arith.constant 0 : index
    %113 = vector.load %arg7[%c0_35, %c0_36] : memref<8x1xf32, #tpu.memory_space<vmem>>, vector<8x1xf32>
    tpu.vector_store %arg7[%c0_35, %c0_36], %112 {strides = array<i32>} : memref<8x1xf32, #tpu.memory_space<vmem>>, vector<8x1xf32>,
    return
  }
  func.func @transform_0(%arg0: i32) -> (i32, i32) {
    %c0_i32 = arith.constant 0 : i32
    %c0_i32_0 = arith.constant 0 : i32
    %c0_i32_1 = arith.constant 0 : i32
    return %c0_i32, %c0_i32_0 : i32, i32
  }
  func.func @transform_1(%arg0: i32) -> (i32, i32) {
    %c0_i32 = arith.constant 0 : i32
    %c0_i32_0 = arith.constant 0 : i32
    %c0_i32_1 = arith.constant 0 : i32
    return %c0_i32, %c0_i32_0 : i32, i32
  }
  func.func @transform_2(%arg0: i32) -> (i32, i32) {
    %c0_i32 = arith.constant 0 : i32
    %c0_i32_0 = arith.constant 0 : i32
    %c0_i32_1 = arith.constant 0 : i32
    return %c0_i32, %c0_i32_0 : i32, i32
  }
  func.func @transform_3(%arg0: i32) -> (i32, i32) {
    %c0_i32 = arith.constant 0 : i32
    %c0_i32_0 = arith.constant 0 : i32
    %c0_i32_1 = arith.constant 0 : i32
    return %c0_i32, %c0_i32_0 : i32, i32
  }
  func.func @transform_5(%arg0: i32) -> (i32, i32) {
    %c0_i32 = arith.constant 0 : i32
    %c0_i32_0 = arith.constant 0 : i32
    %c0_i32_1 = arith.constant 0 : i32
    return %c0_i32, %c0_i32_0 : i32, i32
  }
  func.func @transform_6(%arg0: i32) -> (i32, i32) {
    %c0_i32 = arith.constant 0 : i32
    %c0_i32_0 = arith.constant 0 : i32
    return %arg0, %c0_i32 : i32, i32
  }
}

</mosaic_0001>

<llo_original>
// kernel: tpu_custom_call.1
$region0: #{tpu_custom_call.1}
  #allocation0 [shape = 'u32[]', space=smem, size = 0x4, offset = 0x4, fixed_abs, tag = 'smem constant byte address 0x4 - core index']
  #allocation1 [shape = 'u32[144,128]{1,0:T(1,128)}', space=vmem, size = 0x12000, scoped, tag = 'internal scratch']
  #allocation2 [shape = 'f32[8,128]{1,0:T(8,128)}', space=vmem, size = 0x1000, scoped, tag = 'scratch operand']
  #allocation3 [shape = 's32[1]{0}', space=sflag, size = 0x4, scoped, tag = 'scratch operand']
  #allocation8 [shape = 's32[]', space=sflag, size = 0x4, offset = 0, fixed_abs, tag = 'sflag constant byte address 0x0 - dummy sync flag']
  %s0 = inlined_call_operand.vmem [shape: f32[8,128], index: 0, kind: input, shape index: {}]
  %s1 = inlined_call_operand.hbm [shape: f32[1,8], index: 1, kind: input, shape index: {}]
  %s2 = inlined_call_operand.vmem [shape: s32[8,1], index: 2, kind: input, shape index: {}]
  %s3 = inlined_call_operand.hbm [shape: s32[1,8], index: 3, kind: input, shape index: {}]
  %s4 = inlined_call_operand.vmem [shape: f32[8,128], index: 4, kind: input, shape index: {}]
  %s5 = inlined_call_operand.vmem [shape: f32[1,8], index: 5, kind: input, shape index: {}]
  %s6 = inlined_call_operand.vmem [shape: f32[8,1], index: 6, kind: output, shape index: {}]
  %s7 = sld [smem:[#allocation0]]
  $region72: #{tpu_custom_call.1} parent=0
    _
  %s9 = ssub.s32 1, %s7
  %s10 = scalar_select 0, %s9, %s7
  $region1: #{tpu_custom_call.1} parent=0
    #allocation4 [shape = 'u8[512]{0}', space=vmem, size = 0x400, scoped, tag = 'input window, operand 1, single buffered']
    #allocation5 [shape = 's32[1]{0}', space=sflag, size = 0x4, scoped, tag = 'scoped memory for tpu_custom_call.1']
    #allocation6 [shape = 'u8[512]{0}', space=vmem, size = 0x400, scoped, tag = 'input window, operand 3, single buffered']
    #allocation7 [shape = 's32[1]{0}', space=sflag, size = 0x4, scoped, tag = 'scoped memory for tpu_custom_call.1']
    %11 = vsyncpa [#allocation5], 0
    %12 = vsyncpa [#allocation7], 0
    // Predicated region
    $region2: #{tpu_custom_call.1} parent=1 // pred_check
      _
    $region3: #{tpu_custom_call.1} parent=1 // pred_check_branch
      %14 = sbr.rel (0) target = $region5
    $region4: #{tpu_custom_call.1} parent=1 // pred_region
      _
    $region5: #{tpu_custom_call.1} parent=1 // pred_fallthru
      _
    // Predicated region
    $region6: #{tpu_custom_call.1} parent=1 // pred_check
      _
    $region7: #{tpu_custom_call.1} parent=1 // pred_check_branch
      %16 = sbr.rel (0) target = $region9
    $region8: #{tpu_custom_call.1} parent=1 // pred_region
      %s18 = ssub.s32 16, 16
      %19 = vsyncadd [#allocation5], %s18
      %s21 = sshll.u32 [#allocation4], 4
      %s22 = int_to_ptr.vmem [resolvable:$true] %s21
      %24 = dma.hbm_to_vmem [thread:$0]  %s1, 16, %s22, [#allocation5]
    $region9: #{tpu_custom_call.1} parent=1 // pred_fallthru
      _
    // Predicated region
    $region10: #{tpu_custom_call.1} parent=1 // pred_check
      _
    $region11: #{tpu_custom_call.1} parent=1 // pred_check_branch
      %26 = sbr.rel (0) target = $region13
    $region12: #{tpu_custom_call.1} parent=1 // pred_region
      _
    $region13: #{tpu_custom_call.1} parent=1 // pred_fallthru
      _
    // Predicated region
    $region14: #{tpu_custom_call.1} parent=1 // pred_check
      _
    $region15: #{tpu_custom_call.1} parent=1 // pred_check_branch
      %28 = sbr.rel (0) target = $region17
    $region16: #{tpu_custom_call.1} parent=1 // pred_region
      %s30 = ssub.s32 16, 16
      %31 = vsyncadd [#allocation7], %s30
      %s33 = sshll.u32 [#allocation6], 4
      %s34 = int_to_ptr.vmem [resolvable:$true] %s33
      %36 = dma.hbm_to_vmem [thread:$0]  %s3, 16, %s34, [#allocation7]
    $region17: #{tpu_custom_call.1} parent=1 // pred_fallthru
      _
    // Predicated region
    $region18: #{tpu_custom_call.1} parent=1 // pred_check
      _
    $region19: #{tpu_custom_call.1} parent=1 // pred_check_branch
      %38 = sbr.rel (0) target = $region21
    $region20: #{tpu_custom_call.1} parent=1 // pred_region
      _
    $region21: #{tpu_custom_call.1} parent=1 // pred_fallthru
      _
    // Predicated region
    $region22: #{tpu_custom_call.1} parent=1 // pred_check
      _
    $region23: #{tpu_custom_call.1} parent=1 // pred_check_branch
      %40 = sbr.rel (0) target = $region25
    $region24: #{tpu_custom_call.1} parent=1 // pred_region
      %41 = dma.done [#allocation5], 16
    $region25: #{tpu_custom_call.1} parent=1 // pred_fallthru
      _
    // Predicated region
    $region26: #{tpu_custom_call.1} parent=1 // pred_check
      _
    $region27: #{tpu_custom_call.1} parent=1 // pred_check_branch
      %43 = sbr.rel (0) target = $region29
    $region28: #{tpu_custom_call.1} parent=1 // pred_region
      %44 = dma.done [#allocation7], 16
    $region29: #{tpu_custom_call.1} parent=1 // pred_fallthru
      _
    %p46 = scmp.lt.u32.totalorder 8, 8
    %p47 = pneg %p46
    // Predicated region
    $region30: #{tpu_custom_call.1} parent=1 // pred_check
      _
    $region31: #{tpu_custom_call.1} parent=1 // pred_check_branch
      %49 = sbr.rel (%p46) target = $region33
    $region32: #{tpu_custom_call.1} parent=1 // pred_region
      %s65 = sand.u32 8, 7
      %p66 = scmp.eq.s32.totalorder %s65, 0
      // Predicated region
      $region45: #{tpu_custom_call.1} parent=32 // pred_check
        %p67 = pneg %p66
      $region46: #{tpu_custom_call.1} parent=32 // pred_check_branch
        %69 = sbr.rel (%p67) target = $region48
      $region47: #{tpu_custom_call.1} parent=32 // pred_region
        loop: start=0, step=1, limit=1
        $region49: #{tpu_custom_call.1} parent=47 // loop_pre_header
          _
        $region50: #{tpu_custom_call.1} parent=47 // loop_header
          %s71 = sphi 0, %s75
          %p72 = scmp.ge.s32.totalorder %s71, 1
          %s76 = sphi %s4, %s4
          %s77 = sphi [#allocation2], [#allocation2]
        $region51: #{tpu_custom_call.1} parent=47 // loop_header_branch
          %74 = sbr.rel (%p72) target = $region55
        $region52: #{tpu_custom_call.1} parent=47 // loop_body
          %v78 = vld [vmem:[%s76] sm:$0xff]
          %79 = vst [vmem:[%s77] sm:$0xff] %v78
        $region53: #{tpu_custom_call.1} parent=47 // loop_footer
          %s75 = sadd.s32 1, %s71
        $region54: #{tpu_custom_call.1} parent=47 // loop_footer_branch
          %70 = sbr.rel target = $region50
        $region55: #{tpu_custom_call.1} parent=47 // loop_exit
          _
      $region48: #{tpu_custom_call.1} parent=32 // pred_fallthru
        _
      %p80 = pneg %p66
      // Predicated region
      $region56: #{tpu_custom_call.1} parent=32 // pred_check
        _
      $region57: #{tpu_custom_call.1} parent=32 // pred_check_branch
        %82 = sbr.rel (%p66) target = $region59
      $region58: #{tpu_custom_call.1} parent=32 // pred_region
        %s83 = sand.u32 8, 7
      $region59: #{tpu_custom_call.1} parent=32 // pred_fallthru
        _
    $region33: #{tpu_custom_call.1} parent=1 // pred_fallthru
      _
    // Predicated region
    $region34: #{tpu_custom_call.1} parent=1 // pred_check
      %p50 = pneg %p46
    $region35: #{tpu_custom_call.1} parent=1 // pred_check_branch
      %52 = sbr.rel (%p50) target = $region37
    $region36: #{tpu_custom_call.1} parent=1 // pred_region
      %s53 = sshll.u32 1, 8
      %s54 = ssub.s32 %s53, 1
      loop: start=0, step=1, limit=1
      $region38: #{tpu_custom_call.1} parent=36 // loop_pre_header
        _
      $region39: #{tpu_custom_call.1} parent=36 // loop_header
        %s56 = sphi 0, %s60
        %p57 = scmp.ge.s32.totalorder %s56, 1
        %s61 = sphi %s4, %s4
        %s62 = sphi [#allocation2], [#allocation2]
      $region40: #{tpu_custom_call.1} parent=36 // loop_header_branch
        %59 = sbr.rel (%p57) target = $region44
      $region41: #{tpu_custom_call.1} parent=36 // loop_body
        %v63 = vld [vmem:[%s61] sm:%s54]
        %64 = vst [vmem:[%s62] sm:%s54] %v63
      $region42: #{tpu_custom_call.1} parent=36 // loop_footer
        %s60 = sadd.s32 1, %s56
      $region43: #{tpu_custom_call.1} parent=36 // loop_footer_branch
        %55 = sbr.rel target = $region39
      $region44: #{tpu_custom_call.1} parent=36 // loop_exit
        _
    $region37: #{tpu_custom_call.1} parent=1 // pred_fallthru
      _
    // Predicated region
    $region60: #{tpu_custom_call.1} parent=1 // pred_check
      _
    $region61: #{tpu_custom_call.1} parent=1 // pred_check_branch
      %86 = sbr.rel (0) target = $region63
    $region62: #{tpu_custom_call.1} parent=1 // pred_region
      %87 = vsyncadd [#allocation3], 128
    $region63: #{tpu_custom_call.1} parent=1 // pred_fallthru
      _
    %v88 = vld [vmem:[#allocation4] sm:$0x1]
    %v89 = vld [vmem:[%s0] sm:$0xff]
    %v90 = vld [vmem:[%s2] sm:$0xff]
    %91 = vmatprep.subr.mxu0 0.0
    %92 = vmatpush1.xpose.msra.mxu0 0.0
    %93 = vmatprep.subr.mxu0 0.0
    %94 = vmatpush1.xpose.msra.mxu0 0.0
    %95 = vmatprep.subr.mxu0 0.0
    %96 = vmatpush1.xpose.msra.mxu0 0.0
    %97 = vmatprep.subr.mxu0 0.0
    %98 = vmatpush1.xpose.msra.mxu0 0.0
    %99 = vmatprep.subr.mxu0 0.0
    %100 = vmatpush1.xpose.msra.mxu0 0.0
    %101 = vmatprep.subr.mxu0 0.0
    %102 = vmatpush1.xpose.msra.mxu0 0.0
    %103 = vmatprep.subr.mxu0 0.0
    %104 = vmatpush1.xpose.msra.mxu0 0.0
    %105 = vmatprep.subr.mxu0 0.0
    %106 = vmatpush1.xpose.msra.mxu0 0.0
    %107 = vmatprep.subr.mxu0 0.0
    %108 = vmatpush1.xpose.msra.mxu0 0.0
    %109 = vmatprep.subr.mxu0 0.0
    %110 = vmatpush1.xpose.msra.mxu0 0.0
    %111 = vmatprep.subr.mxu0 0.0
    %112 = vmatpush1.xpose.msra.mxu0 0.0
    %113 = vmatprep.subr.mxu0 0.0
    %114 = vmatpush1.xpose.msra.mxu0 0.0
    %115 = vmatprep.subr.mxu0 0.0
    %116 = vmatpush1.xpose.msra.mxu0 0.0
    %117 = vmatprep.subr.mxu0 0.0
    %118 = vmatpush1.xpose.msra.mxu0 0.0
    %119 = vmatprep.subr.mxu0 0.0
    %120 = vmatpush1.xpose.msra.mxu0 0.0
    %121 = vmatprep.subr.mxu0 0.0
    %122 = vmatpush1.xpose.msra.mxu0 %v89
    %123 = vmatprep.subr.mxu0 0.0
    %124 = vmatpush2.xpose.msra.mxu0 0.0
    %125 = vmatprep.subr.mxu0 0.0
    %126 = vmatpush2.xpose.msra.mxu0 0.0
    %127 = vmatprep.subr.mxu0 0.0
    %128 = vmatpush2.xpose.msra.mxu0 0.0
    %129 = vmatprep.subr.mxu0 0.0
    %130 = vmatpush2.xpose.msra.mxu0 0.0
    %131 = vmatprep.subr.mxu0 0.0
    %132 = vmatpush2.xpose.msra.mxu0 0.0
    %133 = vmatprep.subr.mxu0 0.0
    %134 = vmatpush2.xpose.msra.mxu0 0.0
    %135 = vmatprep.subr.mxu0 0.0
    %136 = vmatpush2.xpose.msra.mxu0 0.0
    %137 = vmatprep.subr.mxu0 0.0
    %138 = vmatpush2.xpose.msra.mxu0 0.0
    %139 = vmatprep.subr.mxu0 0.0
    %140 = vmatpush2.xpose.msra.mxu0 0.0
    %141 = vmatprep.subr.mxu0 0.0
    %142 = vmatpush2.xpose.msra.mxu0 0.0
    %143 = vmatprep.subr.mxu0 0.0
    %144 = vmatpush2.xpose.msra.mxu0 0.0
    %145 = vmatprep.subr.mxu0 0.0
    %146 = vmatpush2.xpose.msra.mxu0 0.0
    %147 = vmatprep.subr.mxu0 0.0
    %148 = vmatpush2.xpose.msra.mxu0 0.0
    %149 = vmatprep.subr.mxu0 0.0
    %150 = vmatpush2.xpose.msra.mxu0 0.0
    %151 = vmatprep.subr.mxu0 0.0
    %152 = vmatpush2.xpose.msra.mxu0 0.0
    %153 = vmatprep.subr.mxu0 0.0
    %154 = vmatpush2.xpose.msra.mxu0 0.0
    %155 = vmatprep.mubr.f32.mxu0 0.0
    %156 = vmatmul.mubr.f32.gmra.mxu0 %v89
    %v157 = vpop.f32.mrf.mxu0
    %v158 = vadd.f32 0.0, %v157
    %v159 = vpop.f32.mrf.mxu0
    %160 = vdwg.mxu0
    %v161 = vmul.f32 %v158, 2.0
    %v163 = vlaneseq
    %v164 = vshrl.u32 %v163, 7
    %v165 = vsub.s32 0, %v164
    %v166 = vrot.slane %v88, %v165
    %v168 = vsub.f32 %v166, %v161
    %v169 = vmul.f32 %v89, %v89
    %170 = vadd.xlane.f32.xlu0 %v169
    %v171 = vpop.xlane.xlu0 %170
    %v172 = vlaneseq
    %v173 = vand.u32 %v172, 127
    %vm174 = vcmp.lt.s32.totalorder %v173, 8
    %v175 = vld [vmem:[#allocation6] sm:$0x1]
    %176 = vset.pattern.permute.xlu0 0
    %177 = vperm.xlu0 %176, %v90
    %v178 = vpop.permute.xlu0 %177
    %v179 = vlaneseq
    %v180 = vshrl.u32 %v179, 7
    %v181 = vsub.s32 0, %v180
    %v182 = vrot.slane %v175, %v181
    %vm183 = vcmp.eq.s32.totalorder %v178, %v182
    %v184 = vsel %vm174, 1, 0
    %vm185 = vcmp.eq.s32.totalorder %v184, 1
    %vm186 = vmand %vm183, %vm185
    %vm187 = vmxor %vm183, 1
    %vm188 = vmand %vm185, %vm187
    %v189 = vsel %vm186, %v168, -1e+30
    %v190 = vsel %vm188, %v168, 1e+30
    %vm191 = vcmask 64512
    %v192 = vsel %vm191, %v189, -inf
    %193 = vmax.xlane.f32.xlu0 %v192
    %v194 = vpop.xlane.xlu0 %193
    %v195 = vsel %vm191, %v190, inf
    %196 = vmin.xlane.f32.xlu0 %v195
    %v197 = vpop.xlane.xlu0 %196
    %vm198 = vcmp.eq.f32.partialorder %v189, %v194
    %v199 = vsel %vm198, %v173, 8
    %v200 = vsel %vm191, %v199, 2147483647
    %v201 = vand.u32 %v200, 65535
    %v202 = vshra.s32 %v200, 16
    %v203 = vcvt.s32.f32 %v201
    %v204 = vcvt.s32.f32 %v202
    %205 = vmin.xlane.f32.xlu0 %v204
    %v206 = vpop.xlane.xlu0 %205
    %vm207 = vcmp.eq.f32.partialorder %v204, %v206
    %v208 = vsel %vm207, %v203, inf
    %209 = vmin.xlane.f32.xlu0 %v208
    %v210 = vpop.xlane.xlu0 %209
    %v211 = vcvt.f32.s32 %v210
    %v212 = vcvt.f32.s32 %v206
    %v213 = vshll.u32 %v212, 16
    %v214 = vadd.s32 %v213, %v211
    %vm215 = vcmp.eq.f32.partialorder %v190, %v197
    %v216 = vsel %vm215, %v173, 8
    %v217 = vsel %vm191, %v216, 2147483647
    %v218 = vand.u32 %v217, 65535
    %v219 = vshra.s32 %v217, 16
    %v220 = vcvt.s32.f32 %v218
    %v221 = vcvt.s32.f32 %v219
    %222 = vmin.xlane.f32.xlu0 %v221
    %v223 = vpop.xlane.xlu0 %222
    %vm224 = vcmp.eq.f32.partialorder %v221, %v223
    %v225 = vsel %vm224, %v220, inf
    %226 = vmin.xlane.f32.xlu0 %v225
    %v227 = vpop.xlane.xlu0 %226
    %v228 = vcvt.f32.s32 %v227
    %v229 = vcvt.f32.s32 %v223
    %v230 = vshll.u32 %v229, 16
    %v231 = vadd.s32 %v230, %v228
    %v232 = vadd.f32 %v194, %v171
    %v233 = vmax.f32 %v232, 1e-12
    %v234 = vrsqrt.pop %v233
    %v235 = vmul.f32 %v233, %v234
    %vm236 = vcmp.eq.f32.partialorder %v233, inf
    %v237 = vsel %vm236, %v233, %v235
    %vm238 = vcmp.eq.f32.partialorder %v233, 0.0
    %v239 = vand.u32 %v233, 2147483648
    %v240 = vsel %vm238, %v239, %v237
    %v241 = vadd.f32 %v197, %v171
    %v242 = vmax.f32 %v241, 1e-12
    %v243 = vrsqrt.pop %v242
    %v244 = vmul.f32 %v242, %v243
    %vm245 = vcmp.eq.f32.partialorder %v242, inf
    %v246 = vsel %vm245, %v242, %v244
    %vm247 = vcmp.eq.f32.partialorder %v242, 0.0
    %v248 = vand.u32 %v242, 2147483648
    %v249 = vsel %vm247, %v248, %v246
    %v250 = vmax.f32 %v240, %v249
    %v251 = vsub.f32 %v240, %v250
    %v252 = vmul.f32 %v251, 1.442695
    %v253 = vpow.pop %v252
    %v254 = vsub.f32 %v249, %v250
    %v255 = vmul.f32 %v254, 1.442695
    %v256 = vpow.pop %v255
    %v257 = vadd.f32 %v253, %v256
    %v258 = vlog2.pop %v257
    %v259 = vmul.f32 %v258, 0.6931472
    %v260 = vadd.f32 %v250, %v259
    %v261 = vsub.f32 %v240, %v260
    %v262 = vsub.f32 %v249, %v260
    %s263 = smul.u32 8, 1
    %s264 = sshll.u32 %s263, 4
    %265 = dma.done [#allocation3], %s264
    %v266 = vld [vmem:[%s5] sm:$0x1]
    %v267 = vld [vmem:[#allocation2] sm:$0xff]
    %268 = vmatprep.subr.mxu0 0.0
    %269 = vmatpush1.xpose.msra.mxu0 0.0
    %270 = vmatprep.subr.mxu0 0.0
    %271 = vmatpush1.xpose.msra.mxu0 0.0
    %272 = vmatprep.subr.mxu0 0.0
    %273 = vmatpush1.xpose.msra.mxu0 0.0
    %274 = vmatprep.subr.mxu0 0.0
    %275 = vmatpush1.xpose.msra.mxu0 0.0
    %276 = vmatprep.subr.mxu0 0.0
    %277 = vmatpush1.xpose.msra.mxu0 0.0
    %278 = vmatprep.subr.mxu0 0.0
    %279 = vmatpush1.xpose.msra.mxu0 0.0
    %280 = vmatprep.subr.mxu0 0.0
    %281 = vmatpush1.xpose.msra.mxu0 0.0
    %282 = vmatprep.subr.mxu0 0.0
    %283 = vmatpush1.xpose.msra.mxu0 0.0
    %284 = vmatprep.subr.mxu0 0.0
    %285 = vmatpush1.xpose.msra.mxu0 0.0
    %286 = vmatprep.subr.mxu0 0.0
    %287 = vmatpush1.xpose.msra.mxu0 0.0
    %288 = vmatprep.subr.mxu0 0.0
    %289 = vmatpush1.xpose.msra.mxu0 0.0
    %290 = vmatprep.subr.mxu0 0.0
    %291 = vmatpush1.xpose.msra.mxu0 0.0
    %292 = vmatprep.subr.mxu0 0.0
    %293 = vmatpush1.xpose.msra.mxu0 0.0
    %294 = vmatprep.subr.mxu0 0.0
    %295 = vmatpush1.xpose.msra.mxu0 0.0
    %296 = vmatprep.subr.mxu0 0.0
    %297 = vmatpush1.xpose.msra.mxu0 0.0
    %298 = vmatprep.subr.mxu0 0.0
    %299 = vmatpush1.xpose.msra.mxu0 %v267
    %300 = vmatprep.subr.mxu0 0.0
    %301 = vmatpush2.xpose.msra.mxu0 0.0
    %302 = vmatprep.subr.mxu0 0.0
    %303 = vmatpush2.xpose.msra.mxu0 0.0
    %304 = vmatprep.subr.mxu0 0.0
    %305 = vmatpush2.xpose.msra.mxu0 0.0
    %306 = vmatprep.subr.mxu0 0.0
    %307 = vmatpush2.xpose.msra.mxu0 0.0
    %308 = vmatprep.subr.mxu0 0.0
    %309 = vmatpush2.xpose.msra.mxu0 0.0
    %310 = vmatprep.subr.mxu0 0.0
    %311 = vmatpush2.xpose.msra.mxu0 0.0
    %312 = vmatprep.subr.mxu0 0.0
    %313 = vmatpush2.xpose.msra.mxu0 0.0
    %314 = vmatprep.subr.mxu0 0.0
    %315 = vmatpush2.xpose.msra.mxu0 0.0
    %316 = vmatprep.subr.mxu0 0.0
    %317 = vmatpush2.xpose.msra.mxu0 0.0
    %318 = vmatprep.subr.mxu0 0.0
    %319 = vmatpush2.xpose.msra.mxu0 0.0
    %320 = vmatprep.subr.mxu0 0.0
    %321 = vmatpush2.xpose.msra.mxu0 0.0
    %322 = vmatprep.subr.mxu0 0.0
    %323 = vmatpush2.xpose.msra.mxu0 0.0
    %324 = vmatprep.subr.mxu0 0.0
    %325 = vmatpush2.xpose.msra.mxu0 0.0
    %326 = vmatprep.subr.mxu0 0.0
    %327 = vmatpush2.xpose.msra.mxu0 0.0
    %328 = vmatprep.subr.mxu0 0.0
    %329 = vmatpush2.xpose.msra.mxu0 0.0
    %330 = vmatprep.subr.mxu0 0.0
    %331 = vmatpush2.xpose.msra.mxu0 0.0
    %332 = vmatprep.mubr.f32.mxu0 0.0
    %333 = vmatmul.mubr.f32.gmra.mxu0 %v267
    %v334 = vpop.f32.mrf.mxu0
    %v335 = vadd.f32 0.0, %v334
    %v336 = vpop.f32.mrf.mxu0
    %337 = vdwg.mxu0
    %v338 = vmul.f32 %v335, 2.0
    %v340 = vlaneseq
    %v341 = vshrl.u32 %v340, 7
    %v342 = vsub.s32 0, %v341
    %v343 = vrot.slane %v266, %v342
    %v345 = vsub.f32 %v343, %v338
    %v346 = vmul.f32 %v267, %v267
    %347 = vadd.xlane.f32.xlu0 %v346
    %v348 = vpop.xlane.xlu0 %347
    %vm349 = vcmp.eq.s32.totalorder %v173, %v214
    %v350 = vsel %vm349, %v345, 0.0
    %v351 = vsel %vm191, %v350, 0.0
    %352 = vadd.xlane.f32.xlu0 %v351
    %v353 = vpop.xlane.xlu0 %352
    %vm354 = vcmp.eq.s32.totalorder %v173, %v231
    %v355 = vsel %vm354, %v345, 0.0
    %v356 = vsel %vm191, %v355, 0.0
    %357 = vadd.xlane.f32.xlu0 %v356
    %v358 = vpop.xlane.xlu0 %357
    %v359 = vadd.f32 %v353, %v348
    %v360 = vmax.f32 %v359, 1e-12
    %v361 = vrsqrt.pop %v360
    %v362 = vmul.f32 %v360, %v361
    %vm363 = vcmp.eq.f32.partialorder %v360, inf
    %v364 = vsel %vm363, %v360, %v362
    %vm365 = vcmp.eq.f32.partialorder %v360, 0.0
    %v366 = vand.u32 %v360, 2147483648
    %v367 = vsel %vm365, %v366, %v364
    %v368 = vadd.f32 %v358, %v348
    %v369 = vmax.f32 %v368, 1e-12
    %v370 = vrsqrt.pop %v369
    %v371 = vmul.f32 %v369, %v370
    %vm372 = vcmp.eq.f32.partialorder %v369, inf
    %v373 = vsel %vm372, %v369, %v371
    %vm374 = vcmp.eq.f32.partialorder %v369, 0.0
    %v375 = vand.u32 %v369, 2147483648
    %v376 = vsel %vm374, %v375, %v373
    %v377 = vmax.f32 %v367, %v376
    %v378 = vsub.f32 %v367, %v377
    %v379 = vmul.f32 %v378, 1.442695
    %v380 = vpow.pop %v379
    %v381 = vsub.f32 %v376, %v377
    %v382 = vmul.f32 %v381, 1.442695
    %v383 = vpow.pop %v382
    %v384 = vadd.f32 %v380, %v383
    %v385 = vrcp.pop %v384
    %v386 = vmul.f32 1.0, %v385
    %v387 = vmul.f32 %v380, %v386
    %v388 = vmul.f32 %v383, %v386
    %v389 = vmul.f32 %v387, %v261
    %v390 = vmul.f32 %v388, %v262
    %v391 = vadd.f32 %v389, %v390
    %v392 = vsub.f32 0.0, %v391
    %vm393 = vcmask 7168
    %394 = vst.msk [vmem:[%s6] sm:$0xff] %vm393, %v392
    // Predicated region
    $region64: #{tpu_custom_call.1} parent=1 // pred_check
      _
    $region65: #{tpu_custom_call.1} parent=1 // pred_check_branch
      %396 = sbr.rel (0) target = $region67
    $region66: #{tpu_custom_call.1} parent=1 // pred_region
      _
    $region67: #{tpu_custom_call.1} parent=1 // pred_fallthru
      _
    // Predicated region
    $region68: #{tpu_custom_call.1} parent=1 // pred_check
      _
    $region69: #{tpu_custom_call.1} parent=1 // pred_check_branch
      %398 = sbr.rel (0) target = $region71
    $region70: #{tpu_custom_call.1} parent=1 // pred_region
      _
    $region71: #{tpu_custom_call.1} parent=1 // pred_fallthru
      _
    %399 = vsyncpa [#allocation5], 1
    %400 = vsyncpa [#allocation7], 1
  %401 = vsyncmov [#allocation3]
  %s402 = vpop.sfrf %401
  %p403 = scmp.eq.s32.totalorder %s402, 0
  %p404 = pneg %p403
  %406 = shalt.err (%p404)

</llo_original>
